<compile_context>
chip_gen: v7x
topology: tpu7x:2x2x1
jax: 0.10.0
libtpu: 0.0.40
codegen_flags: <defaults>
</compile_context>

<pallas_src>
from functools import partial

import jax
import jax.numpy as jnp
from jax.experimental import pallas as pl
from jax.experimental.pallas import tpu as pltpu


def _round_up(x, m):
    return (x + m - 1) // m * m


# ----------------------------------------------------------------------------
# LayerNorm kernel (stand-in for the BERT output normalization), row-tiled
# ----------------------------------------------------------------------------
def _layernorm_kernel(x_ref, g_ref, b_ref, o_ref):
    x = x_ref[...]                                     # (rows_tile, E) f32
    mu = jnp.mean(x, axis=-1, keepdims=True)
    xc = x - mu
    var = jnp.mean(xc * xc, axis=-1, keepdims=True)
    o_ref[...] = xc * jax.lax.rsqrt(var + 1e-12) * g_ref[...] + b_ref[...]


def layernorm(x, gamma, beta):
    B, T, E = x.shape
    rows = B * T
    x2 = x.reshape(rows, E).astype(jnp.float32)
    # Larger row tiles get closer to the HBM roofline for this mem-bound op.
    # NOTE: with E < 128 the output store is a masked vst; fine at these sizes.
    rt = min(512, _round_up(rows, 8))
    rows_p = _round_up(rows, rt)
    if rows_p != rows:
        x2 = jnp.pad(x2, ((0, rows_p - rows), (0, 0)))
    out = pl.pallas_call(
        _layernorm_kernel,
        grid=(rows_p // rt,),
        in_specs=[pl.BlockSpec((rt, E), lambda i: (i, 0)),
                  pl.BlockSpec((1, E), lambda i: (0, 0)),
                  pl.BlockSpec((1, E), lambda i: (0, 0))],
        out_specs=pl.BlockSpec((rt, E), lambda i: (i, 0)),
        out_shape=jax.ShapeDtypeStruct((rows_p, E), jnp.float32),
        compiler_params=pltpu.CompilerParams(dimension_semantics=("parallel",)),
    )(x2, gamma.reshape(1, E).astype(jnp.float32),
      beta.reshape(1, E).astype(jnp.float32))
    return out[:rows].reshape(B, T, E)


# ----------------------------------------------------------------------------
# Bidirectional LSTM kernel (used for both CharBiLSTM and the word BiLSTM)
# ----------------------------------------------------------------------------
def _bilstm_kernel(x_ref, len_ref, wih_ref, whh_f_ref, whh_b_ref, b_ref,
                   out_ref, fin_ref, gx_ref, *, hidden):
    T, bn, Dp = x_ref.shape
    Kp, Gp = whh_f_ref.shape                            # hidden lanes / packed gate lanes

    # ---- hoisted input projection: ONE bf16 MXU matmul for all steps and both
    #      directions (contraction dim Dp is lane-aligned), bias added once,
    #      result stored to the bf16 gate scratch.
    x2 = x_ref[...].reshape(T * bn, Dp)                 # free leading-dim merge
    gx = jnp.dot(x2, wih_ref[...], preferred_element_type=jnp.float32)
    gx_ref[...] = (gx + b_ref[...]).reshape(T, bn, 2 * Gp).astype(jnp.bfloat16)

    lens = len_ref[...]                                 # (bn, 1) int32
    zeros = jnp.zeros((bn, Kp), jnp.float32)
    lane_mask = (jax.lax.broadcasted_iota(jnp.int32, (1, Kp), 1) < hidden
                 ).astype(jnp.float32)                  # zero the padding lanes of h

    def cell(pre, c_prev):
        # pre: (bn, Gp) f32, packed gates [i | f | g | o | 0-pad] of width `hidden`.
        sig = jax.nn.sigmoid(pre)                       # one EUP pass covers i, f, o
        th = jnp.tanh(pre)                              # one EUP pass covers g
        i_al = sig[:, :Kp]
        f_al = pltpu.roll(sig, Gp - hidden, axis=1)[:, :Kp]
        g_al = pltpu.roll(th, Gp - 2 * hidden, axis=1)[:, :Kp]
        o_al = pltpu.roll(sig, Gp - 3 * hidden, axis=1)[:, :Kp]
        # Lanes >= hidden carry bounded garbage; W_hh rows there are zero and the
        # lane mask below keeps h (and hence outputs / finals) clean.
        c_new = f_al * c_prev + i_al * g_al
        h_new = o_al * jnp.tanh(c_new) * lane_mask
        return h_new, c_new

    # ---- fused forward+backward recurrence: the two serial chains interleave.
    def step(t, carry):
        h_f, c_f, h_b, c_b = carry
        tb = T - 1 - t
        pre_f = gx_ref[t, :, pl.ds(0, Gp)] + jnp.dot(
            h_f.astype(jnp.bfloat16), whh_f_ref[...],
            preferred_element_type=jnp.float32)
        pre_b = gx_ref[tb, :, pl.ds(Gp, Gp)] + jnp.dot(
            h_b.astype(jnp.bfloat16), whh_b_ref[...],
            preferred_element_type=jnp.float32)
        hf_new, cf_new = cell(pre_f, c_f)
        hb_new, cb_new = cell(pre_b, c_b)
        valid_f = lens > t                              # packed-seq masking, in-kernel
        valid_b = lens > tb
        out_ref[t, :, pl.ds(0, Kp)] = (
            jnp.where(valid_f, hf_new, zeros).astype(out_ref.dtype))
        out_ref[tb, :, pl.ds(Kp, Kp)] = (
            jnp.where(valid_b, hb_new, zeros).astype(out_ref.dtype))
        h_f = jnp.where(valid_f, hf_new, h_f)           # hold state past seq end
        c_f = jnp.where(valid_f, cf_new, c_f)
        h_b = jnp.where(valid_b, hb_new, h_b)
        c_b = jnp.where(valid_b, cb_new, c_b)
        return h_f, c_f, h_b, c_b

    # unroll only short recurrences; long T would blow up code size / live ranges
    h_f, _, h_b, _ = jax.lax.fori_loop(
        0, T, step, (zeros, zeros, zeros, zeros), unroll=(T <= 16))

    # fused lane-dense final-state store (N, 2*Kp)
    fin_ref[:, pl.ds(0, Kp)] = h_f                      # == h at t = len-1
    fin_ref[:, pl.ds(Kp, Kp)] = h_b                     # == h after t = 0


def _pick_tile_and_vmem(T, N, Dp, Kp, Gp):
    """Per-generation batch tile and explicit VMEM limit."""
    try:
        vmem_cap = int(pltpu.get_tpu_info().vmem_capacity_bytes)
    except Exception:
        vmem_cap = 64 * 2 ** 20          # conservative (v7x per-TensorCore VMEM)
    bn_cap = 256 if vmem_cap >= 100 * 2 ** 20 else 128   # v5e/v6e vs v7x
    budget = int(vmem_cap * 0.6)

    N8 = _round_up(max(N, 8), 8)
    # >= 2 grid blocks when the batch allows it (megacore sharding + pipelining)
    bn = N8 if N8 < 16 else _round_up(pl.cdiv(N8, 2), 8)
    bn = max(8, min(bn_cap, bn))

    def need(b):
        x_blk = T * b * Dp * 2                       # bf16 input block
        gx_tmp = T * b * 2 * Gp * 4                  # f32 projection intermediate
        gx_scr = T * b * 2 * Gp * 2                  # bf16 gate scratch
        out_blk = T * b * 2 * Kp * 2                 # bf16 hidden-stream block
        fin_blk = b * 2 * Kp * 4
        w = (Dp * 2 * Gp + 2 * Kp * Gp) * 2 + 2 * Gp * 4
        return 2 * (x_blk + out_blk + fin_blk + w) + gx_scr + gx_tmp + b * 8

    while bn > 8 and need(bn) > budget:
        bn = max(8, _round_up(bn // 2, 8))

    vmem_limit = int(min(vmem_cap - 4 * 2 ** 20,
                         max(32 * 2 ** 20, need(bn) + 8 * 2 ** 20)))
    return bn, vmem_limit


def bilstm(x_tnd, lens_n, p):
    """x_tnd: (T, N, D) f32, lens_n: (N,) int32.
    Returns (out_f, out_b, fin_f, fin_b) at logical hidden size H (f32)."""
    T, N, D = x_tnd.shape
    H, Kp, Gp, Dp = p['H'], p['Kp'], p['Gp'], p['Dp']

    # pad feature dim to a lane multiple (aligned MXU contraction, free reshape)
    if Dp != D:
        x_tnd = jnp.pad(x_tnd, ((0, 0), (0, 0), (0, Dp - D)))

    bn, vmem_limit = _pick_tile_and_vmem(T, N, Dp, Kp, Gp)
    Np = _round_up(N, bn)
    if Np != N:
        x_tnd = jnp.pad(x_tnd, ((0, 0), (0, Np - N), (0, 0)))
        lens_n = jnp.pad(lens_n, (0, Np - N))            # len 0 => state stays 0
    lens2 = lens_n.reshape(Np, 1).astype(jnp.int32)
    x_bf = x_tnd.astype(jnp.bfloat16)                    # bf16 MXU path; acc in f32

    out, fin = pl.pallas_call(
        partial(_bilstm_kernel, hidden=H),
        grid=(Np // bn,),
        in_specs=[pl.BlockSpec((T, bn, Dp), lambda i: (0, i, 0)),
                  pl.BlockSpec((bn, 1), lambda i: (i, 0)),
                  pl.BlockSpec(p['wih'].shape, lambda i: (0, 0)),
                  pl.BlockSpec(p['whh_f'].shape, lambda i: (0, 0)),
                  pl.BlockSpec(p['whh_b'].shape, lambda i: (0, 0)),
                  pl.BlockSpec(p['b'].shape, lambda i: (0, 0))],
        out_specs=(pl.BlockSpec((T, bn, 2 * Kp), lambda i: (0, i, 0)),
                   pl.BlockSpec((bn, 2 * Kp), lambda i: (i, 0))),
        out_shape=(jax.ShapeDtypeStruct((T, Np, 2 * Kp), jnp.bfloat16),
                   jax.ShapeDtypeStruct((Np, 2 * Kp), jnp.float32)),
        scratch_shapes=[pltpu.VMEM((T, bn, 2 * Gp), jnp.bfloat16)],
        compiler_params=pltpu.CompilerParams(
            dimension_semantics=("parallel",),
            vmem_limit_bytes=vmem_limit),
    )(x_bf, lens2, p['wih'], p['whh_f'], p['whh_b'], p['b'])

    # strip batch / lane padding
    out_f = out[:, :N, :H].astype(jnp.float32)
    out_b = out[:, :N, Kp:Kp + H].astype(jnp.float32)
    fin_f = fin[:N, :H]
    fin_b = fin[:N, Kp:Kp + H]
    return out_f, out_b, fin_f, fin_b


# ----------------------------------------------------------------------------
# parameter init (deterministic, synthetic); weights pre-packed lane-aligned
# ----------------------------------------------------------------------------
def _init(key, shape, scale=0.1):
    return scale * jax.random.normal(key, shape, dtype=jnp.float32)


def _lstm_params(key, D, H):
    # Packed layout: the 4 gates (PyTorch order i, f, g, o) of one direction
    # occupy contiguous lanes [0, 4H) of a Gp = round_up(4H, 128) group; padded
    # lanes / rows are zero so padding stays exactly zero through the recurrence.
    Kp = _round_up(H, 128)               # lanes carrying the hidden state
    Gp = _round_up(4 * H, 128)           # packed 4-gate group width
    Dp = _round_up(D, 128)               # lane-aligned input feature width
    k = jax.random.split(key, 6)

    def pack_ih(w):                      # (D, 4H) -> (Dp, Gp)
        return jnp.zeros((Dp, Gp), jnp.float32).at[:D, :4 * H].set(w)

    def pack_hh(w):                      # (H, 4H) -> (Kp, Gp)
        return jnp.zeros((Kp, Gp), jnp.float32).at[:H, :4 * H].set(w)

    def pack_b(b):                       # (1, 4H) -> (1, Gp); b_ih + b_hh collapsed
        return jnp.zeros((1, Gp), jnp.float32).at[:, :4 * H].set(b)

    wih_f = pack_ih(_init(k[0], (D, 4 * H)))
    whh_f = pack_hh(_init(k[1], (H, 4 * H)))
    b_f = pack_b(_init(k[2], (1, 4 * H)))
    wih_b = pack_ih(_init(k[3], (D, 4 * H)))
    whh_b = pack_hh(_init(k[4], (H, 4 * H)))
    b_b = pack_b(_init(k[5], (1, 4 * H)))

    return dict(
        wih=jnp.concatenate([wih_f, wih_b], axis=1).astype(jnp.bfloat16),  # (Dp, 2Gp)
        whh_f=whh_f.astype(jnp.bfloat16),                                  # (Kp, Gp)
        whh_b=whh_b.astype(jnp.bfloat16),                                  # (Kp, Gp)
        b=jnp.concatenate([b_f, b_b], axis=1),                             # (1, 2Gp) f32
        H=H, Kp=Kp, Gp=Gp, D=D, Dp=Dp,
    )


def init_params(key, cfg):
    ks = jax.random.split(key, 6)
    E = cfg['bert_embedding_size']
    Hc = cfg['charlstm_hidden_dim'] // 2
    D_in = E + cfg['charlstm_hidden_dim']        # use_char_rnn=True, context_emb=none
    return dict(
        bert_tok_emb=_init(ks[0], (cfg['vocab_size'], E), 1.0),
        bert_pos_emb=_init(ks[1], (cfg['max_position'], E), 0.1),
        bert_ln_g=jnp.ones((E,), jnp.float32),
        bert_ln_b=jnp.zeros((E,), jnp.float32),
        char_emb=_init(ks[2], (cfg['char_vocab_size'], cfg['char_emb_size']), 1.0),
        char_lstm=_lstm_params(ks[3], cfg['char_emb_size'], Hc),
        word_lstm=_lstm_params(ks[4], D_in, cfg['hidden_dim']),
    )


# ----------------------------------------------------------------------------
# BertCharEncoder.forward
# ----------------------------------------------------------------------------
def bert_char_encoder_forward(params, word_seq_tensor, word_seq_lens,
                              char_inputs, char_seq_lens):
    B, T = word_seq_tensor.shape

    # ---- "BERT" embedding (deterministic stand-in) -> (B, T, E)
    # TODO(synk): pretrained transformer stack not reproducible in-script.
    tok = jnp.take(params['bert_tok_emb'], word_seq_tensor, axis=0)
    pos = params['bert_pos_emb'][:T][None, :, :]
    bert_emb = layernorm(tok + pos, params['bert_ln_g'], params['bert_ln_b'])

    # ---- CharBiLSTM features -> (B, T, charlstm_hidden_dim)
    _, _, Lc = char_inputs.shape
    flat_chars = char_inputs.reshape(B * T, Lc)
    char_e = jnp.take(params['char_emb'], flat_chars, axis=0)     # (B*T, Lc, Ec)
    char_x = jnp.transpose(char_e, (1, 0, 2))                     # (Lc, B*T, Ec)
    _, _, cf_f, cf_b = bilstm(char_x, char_seq_lens.reshape(B * T),
                              params['char_lstm'])
    char_features = jnp.concatenate([cf_f, cf_b], axis=-1).reshape(B, T, -1)

    # ---- concat + dropout (identity in eval mode)
    word_rep = jnp.concatenate([bert_emb, char_features], axis=2)

    # ---- word BiLSTM with packed-sequence semantics via length masking
    # (sort by length + recover compose to identity under per-sequence masking)
    word_x = jnp.transpose(word_rep, (1, 0, 2))                   # (T, B, D_in)
    out_f, out_b, _, _ = bilstm(word_x, word_seq_lens, params['word_lstm'])
    output = jnp.transpose(jnp.concatenate([out_f, out_b], axis=-1), (1, 0, 2))
    # NOTE: pad_packed_sequence truncates T to max(word_seq_lens); example below
    # uses max(word_seq_lens) == T so shapes match exactly.

    sentence_mask = (word_seq_tensor != 0).astype(jnp.float32)
    return output, sentence_mask


# ----------------------------------------------------------------------------
# main
# ----------------------------------------------------------------------------
if __name__ == "__main__":
    cfg = dict(
        vocab_size=50,
        bert_embedding_size=32,
        char_vocab_size=20,
        char_emb_size=8,
        charlstm_hidden_dim=16,
        hidden_dim=16,
        max_position=16,
    )
    B, T, Lc = 2, 8, 6

    key = jax.random.PRNGKey(0)
    kp, kw, kc, kl = jax.random.split(key, 4)
    params = init_params(kp, cfg)

    word_seq_lens = jnp.array([8, 5], dtype=jnp.int32)            # max == T
    word_ids = jax.random.randint(kw, (B, T), 1, cfg['vocab_size'], dtype=jnp.int32)
    word_seq_tensor = jnp.where(
        jnp.arange(T, dtype=jnp.int32)[None, :] < word_seq_lens[:, None], word_ids, 0)

    char_inputs = jax.random.randint(kc, (B, T, Lc), 1, cfg['char_vocab_size'],
                                     dtype=jnp.int32)
    char_seq_lens = jax.random.randint(kl, (B, T), 1, Lc + 1, dtype=jnp.int32)

    output, sentence_mask = bert_char_encoder_forward(
        params, word_seq_tensor, word_seq_lens, char_inputs, char_seq_lens)
    jax.block_until_ready((output, sentence_mask))

    assert output.shape == (B, T, 2 * cfg['hidden_dim'])
    assert sentence_mask.shape == (B, T)
    print("KERNEL_OK")
</pallas_src>

<mosaic_0001>
module attributes {stable_mosaic.version = 11 : i64} {
  func.func @_layernorm_kernel(%arg0: i32, %arg1: memref<16x32xf32, #tpu.memory_space<vmem>>, %arg2: memref<1x32xf32, #tpu.memory_space<vmem>>, %arg3: memref<1x32xf32, #tpu.memory_space<vmem>>, %arg4: memref<16x32xf32, #tpu.memory_space<vmem>>) attributes {dimension_semantics = [#tpu.dimension_semantics<parallel>], iteration_bounds = array<i64: 1>, scalar_prefetch = 0 : i64, scratch_operands = 0 : i64, tpu.core_type = #tpu.core_type<tc>, window_params = [{transform_indices = @transform_0, window_bounds = array<i64: 16, 32>}, {pipeline_mode = #tpu.pipeline_mode<synchronous>, transform_indices = @transform_1, window_bounds = array<i64: 1, 32>}, {pipeline_mode = #tpu.pipeline_mode<synchronous>, transform_indices = @transform_2, window_bounds = array<i64: 1, 32>}, {transform_indices = @transform_3, window_bounds = array<i64: 16, 32>}]} {
    %c0 = arith.constant 0 : index
    %c0_0 = arith.constant 0 : index
    %0 = vector.load %arg1[%c0, %c0_0] : memref<16x32xf32, #tpu.memory_space<vmem>>, vector<16x32xf32>
    %cst = arith.constant dense<0.000000e+00> : vector<16xf32>
    %1 = vector.multi_reduction <add>, %0, %cst [1] : vector<16x32xf32> to vector<16xf32>
    %2 = vector.shape_cast %1 : vector<16xf32> to vector<16x1xf32>
    %cst_1 = arith.constant 3.200000e+01 : f32
    %3 = vector.broadcast %cst_1 : f32 to vector<16x1xf32>
    %4 = arith.divf %2, %3 : vector<16x1xf32>
    %5 = vector.broadcast %4 : vector<16x1xf32> to vector<16x32xf32>
    %6 = arith.subf %0, %5 : vector<16x32xf32>
    %7 = arith.mulf %6, %6 : vector<16x32xf32>
    %cst_2 = arith.constant dense<0.000000e+00> : vector<16xf32>
    %8 = vector.multi_reduction <add>, %7, %cst_2 [1] : vector<16x32xf32> to vector<16xf32>
    %9 = vector.shape_cast %8 : vector<16xf32> to vector<16x1xf32>
    %cst_3 = arith.constant 3.200000e+01 : f32
    %10 = vector.broadcast %cst_3 : f32 to vector<16x1xf32>
    %11 = arith.divf %9, %10 : vector<16x1xf32>
    %cst_4 = arith.constant 9.99999996E-13 : f32
    %12 = vector.broadcast %cst_4 : f32 to vector<16x1xf32>
    %13 = arith.addf %11, %12 : vector<16x1xf32>
    %14 = math.rsqrt %13 : vector<16x1xf32>
    %15 = vector.broadcast %14 : vector<16x1xf32> to vector<16x32xf32>
    %16 = arith.mulf %6, %15 : vector<16x32xf32>
    %c0_5 = arith.constant 0 : index
    %c0_6 = arith.constant 0 : index
    %17 = vector.load %arg2[%c0_5, %c0_6] : memref<1x32xf32, #tpu.memory_space<vmem>>, vector<1x32xf32>
    %18 = vector.broadcast %17 : vector<1x32xf32> to vector<16x32xf32>
    %19 = arith.mulf %16, %18 : vector<16x32xf32>
    %c0_7 = arith.constant 0 : index
    %c0_8 = arith.constant 0 : index
    %20 = vector.load %arg3[%c0_7, %c0_8] : memref<1x32xf32, #tpu.memory_space<vmem>>, vector<1x32xf32>
    %21 = vector.broadcast %20 : vector<1x32xf32> to vector<16x32xf32>
    %22 = arith.addf %19, %21 : vector<16x32xf32>
    %c0_9 = arith.constant 0 : index
    %c0_10 = arith.constant 0 : index
    %23 = vector.load %arg4[%c0_9, %c0_10] : memref<16x32xf32, #tpu.memory_space<vmem>>, vector<16x32xf32>
    tpu.vector_store %arg4[%c0_9, %c0_10], %22 {strides = array<i32>} : memref<16x32xf32, #tpu.memory_space<vmem>>, vector<16x32xf32>,
    return
  }
  func.func @transform_0(%arg0: i32) -> (i32, i32) {
    %c0_i32 = arith.constant 0 : i32
    %c0_i32_0 = arith.constant 0 : i32
    return %arg0, %c0_i32 : i32, i32
  }
  func.func @transform_1(%arg0: i32) -> (i32, i32) {
    %c0_i32 = arith.constant 0 : i32
    %c0_i32_0 = arith.constant 0 : i32
    %c0_i32_1 = arith.constant 0 : i32
    return %c0_i32, %c0_i32_0 : i32, i32
  }
  func.func @transform_2(%arg0: i32) -> (i32, i32) {
    %c0_i32 = arith.constant 0 : i32
    %c0_i32_0 = arith.constant 0 : i32
    %c0_i32_1 = arith.constant 0 : i32
    return %c0_i32, %c0_i32_0 : i32, i32
  }
  func.func @transform_3(%arg0: i32) -> (i32, i32) {
    %c0_i32 = arith.constant 0 : i32
    %c0_i32_0 = arith.constant 0 : i32
    return %arg0, %c0_i32 : i32, i32
  }
}

</mosaic_0001>

<llo_original>
// kernel: tpu_custom_call.1
$region0: #{tpu_custom_call.1}
  #allocation0 [shape = 'u32[]', space=smem, size = 0x4, offset = 0x4, fixed_abs, tag = 'smem constant byte address 0x4 - core index']
  #allocation1 [shape = 'u32[144,128]{1,0:T(1,128)}', space=vmem, size = 0x12000, scoped, tag = 'internal scratch']
  %s0 = inlined_call_operand.hbm [shape: f32[16,32], index: 0, kind: input, shape index: {}]
  %s1 = inlined_call_operand.vmem [shape: f32[1,32], index: 1, kind: input, shape index: {}]
  %s2 = inlined_call_operand.vmem [shape: f32[1,32], index: 2, kind: input, shape index: {}]
  %s3 = inlined_call_operand.hbm [shape: f32[16,32], index: 3, kind: output, shape index: {}]
  %s4 = sld [smem:[#allocation0]]
  $region26: #{tpu_custom_call.1} parent=0
    _
  %s6 = ssub.s32 1, %s4
  %s7 = scalar_select 0, %s6, %s4
  $region1: #{tpu_custom_call.1} parent=0
    #allocation2 [shape = 'u8[8192]{0}', space=vmem, size = 0x2000, scoped, tag = 'input window, operand 0, single buffered']
    #allocation3 [shape = 's32[1]{0}', space=sflag, size = 0x4, scoped, tag = 'scoped memory for tpu_custom_call.1']
    #allocation4 [shape = 's32[1]{0}', space=sflag, size = 0x4, scoped, tag = 'scoped memory for tpu_custom_call.1']
    #allocation5 [shape = 'u8[8192]{0}', space=vmem, size = 0x2000, scoped, tag = 'output window, operand 0, single buffered']
    %8 = vsyncpa [#allocation3], 0
    %9 = vsyncpa [#allocation4], 0
    // Predicated region
    $region2: #{tpu_custom_call.1} parent=1 // pred_check
      _
    $region3: #{tpu_custom_call.1} parent=1 // pred_check_branch
      %11 = sbr.rel (0) target = $region5
    $region4: #{tpu_custom_call.1} parent=1 // pred_region
      %s13 = ssub.s32 256, 256
      %14 = vsyncadd [#allocation3], %s13
      %s15 = sshll.u32 [#allocation2], 4
      %s16 = int_to_ptr.vmem [resolvable:$true] %s15
      %21 = dma.hbm_to_vmem [thread:$0]  %s0, 256, %s16, [#allocation3], 128, 128, 8
    $region5: #{tpu_custom_call.1} parent=1 // pred_fallthru
      _
    // Predicated region
    $region6: #{tpu_custom_call.1} parent=1 // pred_check
      _
    $region7: #{tpu_custom_call.1} parent=1 // pred_check_branch
      %23 = sbr.rel (0) target = $region9
    $region8: #{tpu_custom_call.1} parent=1 // pred_region
      _
    $region9: #{tpu_custom_call.1} parent=1 // pred_fallthru
      _
    // Predicated region
    $region10: #{tpu_custom_call.1} parent=1 // pred_check
      _
    $region11: #{tpu_custom_call.1} parent=1 // pred_check_branch
      %25 = sbr.rel (0) target = $region13
    $region12: #{tpu_custom_call.1} parent=1 // pred_region
      _
    $region13: #{tpu_custom_call.1} parent=1 // pred_fallthru
      _
    // Predicated region
    $region14: #{tpu_custom_call.1} parent=1 // pred_check
      _
    $region15: #{tpu_custom_call.1} parent=1 // pred_check_branch
      %27 = sbr.rel (0) target = $region17
    $region16: #{tpu_custom_call.1} parent=1 // pred_region
      %28 = dma.done [#allocation3], 256
    $region17: #{tpu_custom_call.1} parent=1 // pred_fallthru
      _
    %v29 = vld [vmem:[#allocation2] sm:$0xff]
    %v30 = vld [vmem:[#allocation2 + $0x8] sm:$0xff]
    %vm31 = vcmask 261120
    %v32 = vsel %vm31, %v29, 0.0
    %33 = vadd.xlane.f32.xlu0 %v32
    %v34 = vpop.xlane.xlu0 %33
    %v35 = vsel %vm31, %v30, 0.0
    %36 = vadd.xlane.f32.xlu0 %v35
    %v37 = vpop.xlane.xlu0 %36
    %v38 = vrcp.pop 32.0
    %v39 = vmul.f32 %v34, %v38
    %v40 = vmul.f32 %v37, %v38
    %v41 = vsub.f32 %v29, %v39
    %v42 = vsub.f32 %v30, %v40
    %v43 = vmul.f32 %v41, %v41
    %v44 = vmul.f32 %v42, %v42
    %v45 = vsel %vm31, %v43, 0.0
    %46 = vadd.xlane.f32.xlu0 %v45
    %v47 = vpop.xlane.xlu0 %46
    %v48 = vsel %vm31, %v44, 0.0
    %49 = vadd.xlane.f32.xlu0 %v48
    %v50 = vpop.xlane.xlu0 %49
    %v51 = vmul.f32 %v47, %v38
    %v52 = vmul.f32 %v50, %v38
    %v53 = vadd.f32 %v51, 1e-12
    %v54 = vadd.f32 %v52, 1e-12
    %v55 = vrsqrt.pop %v53
    %v56 = vrsqrt.pop %v54
    %v57 = vmul.f32 %v41, %v55
    %v58 = vmul.f32 %v42, %v56
    %v59 = vld [vmem:[%s1] sm:$0x1]
    %v61 = vlaneseq
    %v62 = vshrl.u32 %v61, 7
    %v63 = vsub.s32 0, %v62
    %v64 = vrot.slane %v59, %v63
    %v66 = vmul.f32 %v57, %v64
    %v67 = vmul.f32 %v58, %v64
    %v68 = vld [vmem:[%s2] sm:$0x1]
    %v70 = vlaneseq
    %v71 = vshrl.u32 %v70, 7
    %v72 = vsub.s32 0, %v71
    %v73 = vrot.slane %v68, %v72
    %v75 = vadd.f32 %v66, %v73
    %v76 = vadd.f32 %v67, %v73
    %77 = vst.msk [vmem:[#allocation5] sm:$0xff] %vm31, %v75
    %78 = vst.msk [vmem:[#allocation5 + $0x8] sm:$0xff] %vm31, %v76
    // Predicated region
    $region18: #{tpu_custom_call.1} parent=1 // pred_check
      _
    $region19: #{tpu_custom_call.1} parent=1 // pred_check_branch
      %80 = sbr.rel (0) target = $region21
    $region20: #{tpu_custom_call.1} parent=1 // pred_region
      %s82 = ssub.s32 256, 256
      %83 = vsyncadd [#allocation4], %s82
      %s84 = sshll.u32 [#allocation5], 4
      %s85 = int_to_ptr.vmem [resolvable:$true] %s84
      %90 = dma.vmem_to_hbm [thread:$0]  %s85, 256, %s3, [#allocation4], 128, 128, 8
    $region21: #{tpu_custom_call.1} parent=1 // pred_fallthru
      _
    // Predicated region
    $region22: #{tpu_custom_call.1} parent=1 // pred_check
      _
    $region23: #{tpu_custom_call.1} parent=1 // pred_check_branch
      %92 = sbr.rel (0) target = $region25
    $region24: #{tpu_custom_call.1} parent=1 // pred_region
      %93 = dma.done [#allocation4], 256
    $region25: #{tpu_custom_call.1} parent=1 // pred_fallthru
      _
    %94 = vsyncpa [#allocation3], 1
    %95 = vsyncpa [#allocation4], 1

</llo_original>
